<compile_context>
chip_gen: v5e
topology: v5e:2x2
jax: 0.10.0
libtpu: 0.0.40
codegen_flags: <defaults>
</compile_context>

<pallas_src>
import functools

import jax
import jax.numpy as jnp
from jax import lax
from jax.experimental import pallas as pl
from jax.experimental.pallas import tpu as pltpu


_VMEM_LIMIT = 48 * 1024 * 1024     # fits inside v7x's 64 MiB/TC, above the
                                   # 16/32 MiB scoped defaults on v5e/v6e.
_STREAM_BUDGET = 8 * 1024 * 1024   # per-buffer budget for streamed blocks
                                   # (x2 for double buffering).


def _pick_block_n(n, d, itemsize):
    """Largest multiple-of-8 row block whose streamed tile fits the budget."""
    if n * d * itemsize <= _STREAM_BUDGET:
        return n
    bn = (_STREAM_BUDGET // (d * itemsize)) // 8 * 8
    return int(max(8, min(bn, n)))


def _pick_flat_tile(total, rows, itemsize):
    """Largest multiple-of-128 divisor of `total` whose (rows, t) tile fits."""
    if rows * total * itemsize <= _STREAM_BUDGET:
        return int(total)
    target = _STREAM_BUDGET // (rows * itemsize)
    t = (target // 128) * 128
    while t >= 128:
        if total % t == 0:
            return int(t)
        t -= 128
    return int(total)


# ----------------------------------------------------------------------------
# Stage 1: per-sample mean + covariance, N tiled along an "arbitrary" axis.
# ----------------------------------------------------------------------------
def _stats_kernel(x_ref, mean_ref, cov_ref, sum_ref, *, n_total, block_n):
    k = pl.program_id(1)
    last_k = pl.num_programs(1) - 1

    @pl.when(k == 0)
    def _():
        sum_ref[...] = jnp.zeros(sum_ref.shape, jnp.float32)
        cov_ref[...] = jnp.zeros(cov_ref.shape, jnp.float32)

    x_raw = x_ref[0]                                   # (block_n, D)
    x32 = x_raw.astype(jnp.float32)

    if n_total % block_n != 0:                         # mask padded tail rows
        rows = lax.broadcasted_iota(jnp.int32, x32.shape, 0) + k * block_n
        valid = rows < n_total
        x32 = jnp.where(valid, x32, 0.0)
        x_mm = (jnp.where(valid, x_raw, jnp.zeros_like(x_raw))
                if x_raw.dtype == jnp.bfloat16 else x32)
    else:
        x_mm = x_raw if x_raw.dtype == jnp.bfloat16 else x32

    # Row-sum accumulates in row 0 of an (8, D) scratch; rows 1..7 stay zero so
    # the finalize can build sum^T sum with a standard K=8 contraction (no
    # degenerate K=1 outer product / in-kernel transpose).
    sum_ref[0:1, :] = sum_ref[0:1, :] + jnp.sum(x32, axis=0, keepdims=True)

    # x^T x accumulated directly into the resident covariance output block.
    cov_ref[0] = cov_ref[0] + lax.dot_general(
        x_mm, x_mm, (((0,), (0,)), ((), ())),
        preferred_element_type=jnp.float32)

    @pl.when(k == last_k)
    def _():
        inv_n = jnp.float32(1.0 / n_total)
        s = sum_ref[...]                               # (8, D), rows 1..7 zero
        ssq = lax.dot_general(s, s, (((0,), (0,)), ((), ())),
                              preferred_element_type=jnp.float32)  # sum^T sum
        # cov = (x^T x - sum^T sum / N) / (N - 1): one-pass form so N tiles.
        # TODO(synk): two-pass centered variant if inputs carry a huge offset.
        denom = (jnp.float32(1.0 / (n_total - 1)) if n_total > 1
                 else jnp.float32(jnp.inf))            # matches ref's /0 blowup
        cov_ref[0] = (cov_ref[0] - ssq * inv_n) * denom
        mean_ref[0] = s[0:1, :] * inv_n


# ----------------------------------------------------------------------------
# Stage 2: all pairs at once via the Gram identity, masked by W.
# ----------------------------------------------------------------------------
def _pair_kernel(w_ref, mean_ref, covf_ref, out_ref, gram_ref):
    kc = pl.program_id(0)

    @pl.when(kc == 0)
    def _():
        gram_ref[...] = jnp.zeros(gram_ref.shape, jnp.float32)

    c = covf_ref[...]                                  # (B, tile) f32
    gram_ref[...] += lax.dot_general(
        c, c, (((1,), (1,)), ((), ())), preferred_element_type=jnp.float32)

    @pl.when(kc == pl.num_programs(0) - 1)
    def _():
        w = w_ref[...]                                 # (B, B) pair weights
        b = w.shape[0]
        row = lax.broadcasted_iota(jnp.int32, (b, b), 0)
        col = lax.broadcasted_iota(jnp.int32, (b, b), 1)
        eye = row == col

        def masked_sq_sum(g):
            # sum_ij W_ij * ||a_i - a_j||^2 with ||a_i-a_j||^2 = G_ii+G_jj-2G_ij
            diag = jnp.where(eye, g, 0.0)
            n_i = jnp.sum(diag, axis=1, keepdims=True)   # (B, 1)
            n_j = jnp.sum(diag, axis=0, keepdims=True)   # (1, B)
            return jnp.sum(w * (n_i + n_j - 2.0 * g))

        m = mean_ref[...]                              # (B, D) f32
        g_mean = lax.dot_general(m, m, (((1,), (1,)), ((), ())),
                                 preferred_element_type=jnp.float32)
        d = jnp.float32(mean_ref.shape[1])
        loss_sum = masked_sq_sum(g_mean) / d + masked_sq_sum(gram_ref[...]) / (d * d)
        out_ref[...] = jnp.full(out_ref.shape, loss_sum, jnp.float32)


# ----------------------------------------------------------------------------
# Wrapper
# ----------------------------------------------------------------------------
def coral_loss(features, domains):
    """Pallas implementation of CORAL.forward(features, domains)."""
    B, N, D = features.shape
    if B < 2:
        return jnp.float32(0.0)

    itemsize = jnp.dtype(features.dtype).itemsize

    # ---- Stage 1: per-sample statistics (N-tiled) ----------------------------
    block_n = _pick_block_n(N, D, itemsize)
    num_k = -(-N // block_n)

    stats_cost = pl.CostEstimate(
        flops=int(B * (2 * N * D * D + 2 * N * D + 3 * D * D)),
        transcendentals=0,
        bytes_accessed=int(B * N * D * itemsize + B * (D * D + D) * 4))

    means, covs = pl.pallas_call(
        functools.partial(_stats_kernel, n_total=N, block_n=block_n),
        out_shape=(jax.ShapeDtypeStruct((B, 1, D), jnp.float32),
                   jax.ShapeDtypeStruct((B, D, D), jnp.float32)),
        grid_spec=pltpu.PrefetchScalarGridSpec(
            num_scalar_prefetch=0,
            grid=(B, num_k),
            in_specs=[pl.BlockSpec((1, block_n, D), lambda b, k: (b, k, 0))],
            out_specs=(pl.BlockSpec((1, 1, D), lambda b, k: (b, 0, 0)),
                       pl.BlockSpec((1, D, D), lambda b, k: (b, 0, 0))),
            scratch_shapes=[pltpu.VMEM((8, D), jnp.float32)]),
        compiler_params=pltpu.CompilerParams(
            dimension_semantics=("parallel", "arbitrary"),
            vmem_limit_bytes=_VMEM_LIMIT),
        cost_estimate=stats_cost,
    )(features)

    # ---- Pair weights (tiny B x B glue, done in XLA) -------------------------
    dom = domains.reshape(B)
    rows = jnp.arange(B)[:, None]
    cols = jnp.arange(B)[None, :]
    w = ((dom[:, None] != dom[None, :]) & (cols > rows)).astype(jnp.float32)
    num = jnp.sum(w)

    # ---- Stage 2: Gram-matmul pair reduction ---------------------------------
    means2d = means.reshape(B, D)          # free relabels (contiguous)
    covs_flat = covs.reshape(B, D * D)
    flat = D * D
    tile = _pick_flat_tile(flat, B, 4)
    num_kc = flat // tile

    pair_cost = pl.CostEstimate(
        flops=int(2 * B * B * (flat + D) + 10 * B * B),
        transcendentals=0,
        bytes_accessed=int(B * flat * 4 + B * D * 4 + B * B * 4 + 8 * 128 * 4))

    out = pl.pallas_call(
        _pair_kernel,
        out_shape=jax.ShapeDtypeStruct((8, 128), jnp.float32),
        grid_spec=pltpu.PrefetchScalarGridSpec(
            num_scalar_prefetch=0,
            grid=(num_kc,),
            in_specs=[pl.BlockSpec((B, B), lambda kc: (0, 0)),
                      pl.BlockSpec((B, D), lambda kc: (0, 0)),
                      pl.BlockSpec((B, tile), lambda kc: (0, kc))],
            out_specs=pl.BlockSpec((8, 128), lambda kc: (0, 0)),
            scratch_shapes=[pltpu.VMEM((B, B), jnp.float32)]),
        compiler_params=pltpu.CompilerParams(
            dimension_semantics=("arbitrary",),
            vmem_limit_bytes=_VMEM_LIMIT),
        cost_estimate=pair_cost,
    )(w, means2d, covs_flat)

    loss_sum = out[0, 0]
    # PyTorch semantics: divide only when num > 1 (num == 1 keeps the raw sum,
    # num == 0 returns 0).
    loss = jnp.where(num > 1, loss_sum / jnp.maximum(num, 1.0), loss_sum)
    return loss


# ----------------------------------------------------------------------------
# Pure-JAX reference mirroring the PyTorch module.
# ----------------------------------------------------------------------------
def coral_ref(features, domains):
    def coral_cal(x, y):
        mean_x = x.mean(0, keepdims=True)
        mean_y = y.mean(0, keepdims=True)
        cx = x - mean_x
        cy = y - mean_y
        cova_x = cx.T @ cx / (x.shape[0] - 1)
        cova_y = cy.T @ cy / (y.shape[0] - 1)
        return ((mean_x - mean_y) ** 2).mean() + ((cova_x - cova_y) ** 2).mean()

    bz = features.shape[0]
    loss = 0.0
    num = 0
    for i in range(bz):
        for j in range(i + 1, bz):
            if int(domains[i]) != int(domains[j]):
                num += 1
                loss = loss + coral_cal(features[i], features[j])
    if num > 1:
        loss = loss / num
    return jnp.asarray(loss, jnp.float32)


if __name__ == "__main__":
    key = jax.random.PRNGKey(0)
    B, N, D = 4, 16, 32
    features = jax.random.normal(key, (B, N, D), dtype=jnp.float32)
    domains = jnp.array([0, 0, 1, 1], dtype=jnp.int32)

    out = coral_loss(features, domains)
    jax.block_until_ready(out)

    ref = coral_ref(features, domains)
    assert jnp.allclose(out, ref, rtol=5e-4, atol=1e-5), (out, ref)

    print("KERNEL_OK")
</pallas_src>

<mosaic_0001>
module attributes {stable_mosaic.version = 11 : i64} {
  func.func @_stats_kernel(%arg0: i32, %arg1: i32, %arg2: memref<1x16x32xf32, #tpu.memory_space<vmem>>, %arg3: memref<1x1x32xf32, #tpu.memory_space<vmem>>, %arg4: memref<1x32x32xf32, #tpu.memory_space<vmem>>, %arg5: memref<8x32xf32, #tpu.memory_space<vmem>>) attributes {dimension_semantics = [#tpu.dimension_semantics<parallel>, #tpu.dimension_semantics<arbitrary>], iteration_bounds = array<i64: 4, 1>, scalar_prefetch = 0 : i64, scratch_operands = 1 : i64, tpu.core_type = #tpu.core_type<tc>, window_params = [{transform_indices = @transform_0, window_bounds = array<i64: 1, 16, 32>}, {transform_indices = @transform_1, window_bounds = array<i64: 1, 1, 32>}, {transform_indices = @transform_2, window_bounds = array<i64: 1, 32, 32>}]} {
    %c0_i32 = arith.constant 0 : i32
    %0 = arith.cmpi eq, %arg1, %c0_i32 : i32
    %1 = arith.extui %0 : i1 to i32
    %c0_i32_0 = arith.constant 0 : i32
    %2 = arith.cmpi ne, %1, %c0_i32_0 : i32
    scf.if %2 {
      %cst_16 = arith.constant 0.000000e+00 : f32
      %20 = vector.broadcast %cst_16 : f32 to vector<8x32xf32>
      %c0_17 = arith.constant 0 : index
      %c0_18 = arith.constant 0 : index
      %21 = vector.load %arg5[%c0_17, %c0_18] : memref<8x32xf32, #tpu.memory_space<vmem>>, vector<8x32xf32>
      tpu.vector_store %arg5[%c0_17, %c0_18], %20 {strides = array<i32>} : memref<8x32xf32, #tpu.memory_space<vmem>>, vector<8x32xf32>,
      %cst_19 = arith.constant 0.000000e+00 : f32
      %22 = vector.broadcast %cst_19 : f32 to vector<1x32x32xf32>
      %c0_20 = arith.constant 0 : index
      %c0_21 = arith.constant 0 : index
      %c0_22 = arith.constant 0 : index
      %23 = vector.load %arg4[%c0_20, %c0_21, %c0_22] : memref<1x32x32xf32, #tpu.memory_space<vmem>>, vector<1x32x32xf32>
      tpu.vector_store %arg4[%c0_20, %c0_21, %c0_22], %22 {strides = array<i32>} : memref<1x32x32xf32, #tpu.memory_space<vmem>>, vector<1x32x32xf32>,
    } else {
    }
    %c0 = arith.constant 0 : index
    %c0_1 = arith.constant 0 : index
    %c0_2 = arith.constant 0 : index
    %3 = vector.load %arg2[%c0, %c0_1, %c0_2] : memref<1x16x32xf32, #tpu.memory_space<vmem>>, vector<1x16x32xf32>
    %4 = vector.shape_cast %3 : vector<1x16x32xf32> to vector<16x32xf32>
    %c0_3 = arith.constant 0 : index
    %c0_4 = arith.constant 0 : index
    %5 = vector.load %arg5[%c0_3, %c0_4] : memref<8x32xf32, #tpu.memory_space<vmem>>, vector<1x32xf32>
    %cst = arith.constant dense<0.000000e+00> : vector<32xf32>
    %6 = vector.multi_reduction <add>, %4, %cst [0] : vector<16x32xf32> to vector<32xf32>
    %7 = vector.shape_cast %6 : vector<32xf32> to vector<1x32xf32>
    %8 = arith.addf %5, %7 : vector<1x32xf32>
    %c0_5 = arith.constant 0 : index
    %c0_6 = arith.constant 0 : index
    %9 = vector.load %arg5[%c0_5, %c0_6] : memref<8x32xf32, #tpu.memory_space<vmem>>, vector<1x32xf32>
    tpu.vector_store %arg5[%c0_5, %c0_6], %8 {strides = array<i32>} : memref<8x32xf32, #tpu.memory_space<vmem>>, vector<1x32xf32>,
    %c0_7 = arith.constant 0 : index
    %c0_8 = arith.constant 0 : index
    %c0_9 = arith.constant 0 : index
    %10 = vector.load %arg4[%c0_7, %c0_8, %c0_9] : memref<1x32x32xf32, #tpu.memory_space<vmem>>, vector<1x32x32xf32>
    %11 = vector.shape_cast %10 : vector<1x32x32xf32> to vector<32x32xf32>
    %cst_10 = arith.constant dense<0.000000e+00> : vector<32x32xf32>
    %12 = tpu.matmul %4, %4, %cst_10 {dimension_numbers = #tpu.dot_dimension_numbers<[0], [0], [1], [1], [0, 1, 1, 1], [], []>} : vector<16x32xf32>, vector<16x32xf32>, vector<32x32xf32> -> vector<32x32xf32>
    %13 = arith.addf %11, %12 : vector<32x32xf32>
    %c0_11 = arith.constant 0 : index
    %c0_12 = arith.constant 0 : index
    %c0_13 = arith.constant 0 : index
    %14 = vector.load %arg4[%c0_11, %c0_12, %c0_13] : memref<1x32x32xf32, #tpu.memory_space<vmem>>, vector<1x32x32xf32>
    %15 = vector.shape_cast %14 : vector<1x32x32xf32> to vector<32x32xf32>
    %16 = vector.shape_cast %13 : vector<32x32xf32> to vector<1x32x32xf32>
    tpu.vector_store %arg4[%c0_11, %c0_12, %c0_13], %16 {strides = array<i32>} : memref<1x32x32xf32, #tpu.memory_space<vmem>>, vector<1x32x32xf32>,
    %c0_i32_14 = arith.constant 0 : i32
    %17 = arith.cmpi eq, %arg1, %c0_i32_14 : i32
    %18 = arith.extui %17 : i1 to i32
    %c0_i32_15 = arith.constant 0 : i32
    %19 = arith.cmpi ne, %18, %c0_i32_15 : i32
    scf.if %19 {
      %c0_16 = arith.constant 0 : index
      %c0_17 = arith.constant 0 : index
      %20 = vector.load %arg5[%c0_16, %c0_17] : memref<8x32xf32, #tpu.memory_space<vmem>>, vector<8x32xf32>
      %cst_18 = arith.constant dense<0.000000e+00> : vector<32x32xf32>
      %21 = tpu.matmul %20, %20, %cst_18 {dimension_numbers = #tpu.dot_dimension_numbers<[0], [0], [1], [1], [0, 1, 1, 1], [], []>} : vector<8x32xf32>, vector<8x32xf32>, vector<32x32xf32> -> vector<32x32xf32>
      %c0_19 = arith.constant 0 : index
      %c0_20 = arith.constant 0 : index
      %c0_21 = arith.constant 0 : index
      %22 = vector.load %arg4[%c0_19, %c0_20, %c0_21] : memref<1x32x32xf32, #tpu.memory_space<vmem>>, vector<1x32x32xf32>
      %23 = vector.shape_cast %22 : vector<1x32x32xf32> to vector<32x32xf32>
      %cst_22 = arith.constant 6.250000e-02 : f32
      %24 = vector.broadcast %cst_22 : f32 to vector<32x32xf32>
      %25 = arith.mulf %21, %24 : vector<32x32xf32>
      %26 = arith.subf %23, %25 : vector<32x32xf32>
      %cst_23 = arith.constant 0.0666666701 : f32
      %27 = vector.broadcast %cst_23 : f32 to vector<32x32xf32>
      %28 = arith.mulf %26, %27 : vector<32x32xf32>
      %c0_24 = arith.constant 0 : index
      %c0_25 = arith.constant 0 : index
      %c0_26 = arith.constant 0 : index
      %29 = vector.load %arg4[%c0_24, %c0_25, %c0_26] : memref<1x32x32xf32, #tpu.memory_space<vmem>>, vector<1x32x32xf32>
      %30 = vector.shape_cast %29 : vector<1x32x32xf32> to vector<32x32xf32>
      %31 = vector.shape_cast %28 : vector<32x32xf32> to vector<1x32x32xf32>
      tpu.vector_store %arg4[%c0_24, %c0_25, %c0_26], %31 {strides = array<i32>} : memref<1x32x32xf32, #tpu.memory_space<vmem>>, vector<1x32x32xf32>,
      %32 = vector.extract_strided_slice %20 {offsets = [0, 0], sizes = [1, 32], strides = [1, 1]} : vector<8x32xf32> to vector<1x32xf32>
      %cst_27 = arith.constant 6.250000e-02 : f32
      %33 = vector.broadcast %cst_27 : f32 to vector<1x32xf32>
      %34 = arith.mulf %32, %33 : vector<1x32xf32>
      %c0_28 = arith.constant 0 : index
      %c0_29 = arith.constant 0 : index
      %c0_30 = arith.constant 0 : index
      %35 = vector.load %arg3[%c0_28, %c0_29, %c0_30] : memref<1x1x32xf32, #tpu.memory_space<vmem>>, vector<1x1x32xf32>
      %36 = vector.shape_cast %35 : vector<1x1x32xf32> to vector<1x32xf32>
      %37 = vector.shape_cast %34 : vector<1x32xf32> to vector<1x1x32xf32>
      tpu.vector_store %arg3[%c0_28, %c0_29, %c0_30], %37 {strides = array<i32>} : memref<1x1x32xf32, #tpu.memory_space<vmem>>, vector<1x1x32xf32>,
    } else {
    }
    return
  }
  func.func @transform_0(%arg0: i32, %arg1: i32) -> (i32, i32, i32) {
    %c0_i32 = arith.constant 0 : i32
    %c0_i32_0 = arith.constant 0 : i32
    return %arg0, %arg1, %c0_i32 : i32, i32, i32
  }
  func.func @transform_1(%arg0: i32, %arg1: i32) -> (i32, i32, i32) {
    %c0_i32 = arith.constant 0 : i32
    %c0_i32_0 = arith.constant 0 : i32
    %c0_i32_1 = arith.constant 0 : i32
    return %arg0, %c0_i32, %c0_i32_0 : i32, i32, i32
  }
  func.func @transform_2(%arg0: i32, %arg1: i32) -> (i32, i32, i32) {
    %c0_i32 = arith.constant 0 : i32
    %c0_i32_0 = arith.constant 0 : i32
    %c0_i32_1 = arith.constant 0 : i32
    return %arg0, %c0_i32, %c0_i32_0 : i32, i32, i32
  }
}

</mosaic_0001>

<llo_original>
// kernel: tpu_custom_call.1
$region0: #{tpu_custom_call.1}
  #allocation0 [shape = 'u32[]', space=smem, size = 0x4, offset = 0x4, fixed_abs, tag = 'smem constant byte address 0x4 - core index']
  #allocation1 [shape = 'u32[72,128]{1,0:T(1,128)}', space=vmem, size = 0x9000, scoped, tag = 'internal scratch']
  #allocation2 [shape = 'f32[8,32]{1,0:T(8,128)}', space=vmem, size = 0x1000, scoped, tag = 'scratch operand']
  %s0 = inlined_call_operand.hbm [shape: f32[4,16,32], index: 0, kind: input, shape index: {}]
  %s1 = inlined_call_operand.hbm [shape: f32[4,1,32], index: 1, kind: output, shape index: {0}]
  %s2 = inlined_call_operand.hbm [shape: f32[4,32,32], index: 2, kind: output, shape index: {1}]
  %3 = xla_tuple %s1, %s2
  %s4 = sld [smem:[#allocation0]]
  $region57: #{tpu_custom_call.1} parent=0
    _
  %s6 = ssub.s32 1, %s4
  %s7 = scalar_select 0, %s6, %s4
  $region1: #{tpu_custom_call.1} parent=0
    #allocation3 [shape = 'u8[16384]{0}', space=vmem, size = 0x4000, scoped, tag = 'input window, operand 0']
    #allocation4 [shape = 's32[2]{0}', space=sflag, size = 0x8, scoped, tag = 'scoped memory for tpu_custom_call.1']
    #allocation5 [shape = 's32[2]{0}', space=sflag, size = 0x8, scoped, tag = 'scoped memory for tpu_custom_call.1']
    #allocation6 [shape = 'u8[1024]{0}', space=vmem, size = 0x400, scoped, tag = 'output window, operand 0']
    #allocation7 [shape = 'u8[32768]{0}', space=vmem, size = 0x8000, scoped, tag = 'output window, operand 1']
    #allocation8 [shape = 's32[2]{0}', space=sflag, size = 0x8, scoped, tag = 'scoped memory for tpu_custom_call.1']
    %8 = vsyncpa [#allocation4], 0
    %s9 = scalar_lea.sflag [#allocation4], 1
    %10 = vsyncpa %s9, 0
    %11 = vsyncpa [#allocation5], 0
    %s12 = scalar_lea.sflag [#allocation5], 1
    %13 = vsyncpa %s12, 0
    %14 = vsyncpa [#allocation8], 0
    %s15 = scalar_lea.sflag [#allocation8], 1
    %16 = vsyncpa %s15, 0
    loop: start=0, step=1, limit=6
    $region2: #{tpu_custom_call.1} parent=1 // loop_pre_header
      _
    $region3: #{tpu_custom_call.1} parent=1 // loop_header
      %s18 = sphi 0, %s22
      %p19 = scmp.ge.s32.totalorder %s18, 6
      %s25 = sphi 0, %s37
      %s26 = sphi 0, %s33
      %s27 = sphi 0, %s25
      %s28 = sphi 0, %s26
      %s29 = sphi 0, %s27
      %s30 = sphi 0, %s28
      %s42 = sphi 0, %s44
      %s45 = sphi 0, %s42
      %s46 = sphi 0, %s45
      %s62 = sphi 0, %s46
      %s68 = sphi 0, %s70
      %s71 = sphi 0, %s68
      %s72 = sphi 0, %s71
      %s88 = sphi 0, %s72
      %s94 = sphi 0, %s96
      %s97 = sphi 0, %s94
      %s98 = sphi 0, %s97
      %s114 = sphi 0, %s98
    $region4: #{tpu_custom_call.1} parent=1 // loop_header_branch
      %21 = sbr.rel (%p19) target = $region8
    $region5: #{tpu_custom_call.1} parent=1 // loop_body
      %s23 = ssub.s32 %s18, 1
      %s24 = ssub.s32 %s18, 2
      %s31 = sadd.s32 1, %s26
      %p32 = scmp.ge.s32.totalorder %s31, 1
      %s33 = scalar_select %p32, 0, %s31
      %s34 = sadd.s32 1, %s25
      %s35 = scalar_select %p32, %s34, %s25
      %p36 = scmp.ge.s32.totalorder %s35, 4
      %s37 = scalar_select %p36, 0, %s35
      %s38 = ssub.s32 %s25, %s37
      %s39 = ssub.s32 %s26, %s33
      %s40 = sor.u32 %s38, %s39
      %p41 = scmp.eq.s32.totalorder %s40, 0
      %s43 = sadd.s32 %s42, 1
      %s44 = scalar_select %p41, %s42, %s43
      %p47 = pneg %p41
      %p48 = scmp.eq.s32.totalorder %s18, 3
      %p49 = por %p47, %p48
      %p50 = scmp.ne.s32.totalorder %s42, %s45
      %p51 = scmp.eq.s32.totalorder %s18, 0
      %p52 = por %p50, %p51
      %p53 = scmp.ne.s32.totalorder %s42, %s45
      %p54 = scmp.eq.s32.totalorder %s23, 3
      %p55 = por %p53, %p54
      %p56 = scmp.ne.s32.totalorder %s45, %s46
      %p57 = scmp.eq.s32.totalorder %s23, 0
      %p58 = por %p56, %p57
      %p59 = scmp.ne.s32.totalorder %s45, %s46
      %p60 = scmp.eq.s32.totalorder %s24, 3
      %p61 = por %p59, %p60
      %p63 = scmp.ne.s32.totalorder %s46, %s62
      %p64 = scmp.eq.s32.totalorder %s24, 0
      %p65 = por %p63, %p64
      %s66 = ssub.s32 %s25, %s37
      %p67 = scmp.eq.s32.totalorder %s66, 0
      %s69 = sadd.s32 %s68, 1
      %s70 = scalar_select %p67, %s68, %s69
      %p73 = pneg %p67
      %p74 = scmp.eq.s32.totalorder %s18, 3
      %p75 = por %p73, %p74
      %p76 = scmp.ne.s32.totalorder %s68, %s71
      %p77 = scmp.eq.s32.totalorder %s18, 0
      %p78 = por %p76, %p77
      %p79 = scmp.ne.s32.totalorder %s68, %s71
      %p80 = scmp.eq.s32.totalorder %s23, 3
      %p81 = por %p79, %p80
      %p82 = scmp.ne.s32.totalorder %s71, %s72
      %p83 = scmp.eq.s32.totalorder %s23, 0
      %p84 = por %p82, %p83
      %p85 = scmp.ne.s32.totalorder %s71, %s72
      %p86 = scmp.eq.s32.totalorder %s24, 3
      %p87 = por %p85, %p86
      %p89 = scmp.ne.s32.totalorder %s72, %s88
      %p90 = scmp.eq.s32.totalorder %s24, 0
      %p91 = por %p89, %p90
      %s92 = ssub.s32 %s25, %s37
      %p93 = scmp.eq.s32.totalorder %s92, 0
      %s95 = sadd.s32 %s94, 1
      %s96 = scalar_select %p93, %s94, %s95
      %p99 = pneg %p93
      %p100 = scmp.eq.s32.totalorder %s18, 3
      %p101 = por %p99, %p100
      %p102 = scmp.ne.s32.totalorder %s94, %s97
      %p103 = scmp.eq.s32.totalorder %s18, 0
      %p104 = por %p102, %p103
      %p105 = scmp.ne.s32.totalorder %s94, %s97
      %p106 = scmp.eq.s32.totalorder %s23, 3
      %p107 = por %p105, %p106
      %p108 = scmp.ne.s32.totalorder %s97, %s98
      %p109 = scmp.eq.s32.totalorder %s23, 0
      %p110 = por %p108, %p109
      %p111 = scmp.ne.s32.totalorder %s97, %s98
      %p112 = scmp.eq.s32.totalorder %s24, 3
      %p113 = por %p111, %p112
      %p115 = scmp.ne.s32.totalorder %s98, %s114
      %p116 = scmp.eq.s32.totalorder %s24, 0
      %p117 = por %p115, %p116
      %p118 = scmp.le.s32.totalorder 1, %s18
      %p119 = scmp.lt.s32.totalorder %s18, 5
      %p120 = pnand %p118, %p119
      %p121 = pneg %p120
      // Predicated region
      $region9: #{tpu_custom_call.1} parent=5 // pred_check
        _
      $region10: #{tpu_custom_call.1} parent=5 // pred_check_branch
        %123 = sbr.rel (%p120) target = $region12
      $region11: #{tpu_custom_call.1} parent=5 // pred_region
        %s124 = ssub.s32 %s18, 1
      $region12: #{tpu_custom_call.1} parent=5 // pred_fallthru
        _
      %p125 = scmp.lt.s32.totalorder %s18, 4
      // Predicated region
      $region13: #{tpu_custom_call.1} parent=5 // pred_check
        %p126 = pneg %p125
      $region14: #{tpu_custom_call.1} parent=5 // pred_check_branch
        %128 = sbr.rel (%p126) target = $region16
      $region15: #{tpu_custom_call.1} parent=5 // pred_region
        // Predicated region
        $region17: #{tpu_custom_call.1} parent=15 // pred_check
          %p129 = pneg %p52
        $region18: #{tpu_custom_call.1} parent=15 // pred_check_branch
          %131 = sbr.rel (%p129) target = $region20
        $region19: #{tpu_custom_call.1} parent=15 // pred_region
          %s132 = sand.u32 %s42, 1
          %s133 = scalar_lea.sflag [#allocation4], %s132
          %s134 = sand.u32 %s42, 1
          %s135 = smul.addr %s134, 16
          %s136 = scalar_lea.vmem [#allocation3], %s135
          %s137 = smul.u32 2, %s26
          %139 = vsyncadd %s133, 0
          %s140 = smul.addr %s25, 2
          %s141 = sadd.s32 %s137, %s140
          %s142 = smul.addr %s141, 8
          %s143 = scalar_lea.hbm %s0, %s142
          %s144 = sshll.u32 %s143, 4
          %s145 = int_to_ptr.hbm [resolvable:$true] %s144
          %s146 = sshll.u32 %s136, 4
          %s147 = int_to_ptr.vmem [resolvable:$true] %s146
          %152 = dma.hbm_to_vmem [thread:$0]  %s145, 256, %s147, %s133, 128, 128, 8
        $region20: #{tpu_custom_call.1} parent=15 // pred_fallthru
          _
      $region16: #{tpu_custom_call.1} parent=5 // pred_fallthru
        _
      %p153 = scmp.le.s32.totalorder 1, %s18
      %p154 = scmp.lt.s32.totalorder %s18, 5
      %p155 = pnand %p153, %p154
      %p156 = pneg %p155
      // Predicated region
      $region21: #{tpu_custom_call.1} parent=5 // pred_check
        _
      $region22: #{tpu_custom_call.1} parent=5 // pred_check_branch
        %158 = sbr.rel (%p155) target = $region24
      $region23: #{tpu_custom_call.1} parent=5 // pred_region
        %s159 = ssub.s32 %s18, 1
        %s160 = sand.u32 %s45, 1
        %s161 = scalar_lea.sflag [#allocation4], %s160
        %s162 = sand.u32 %s45, 1
        %s163 = smul.addr %s162, 16
        %s164 = scalar_lea.vmem [#allocation3], %s163
        // Predicated region
        $region25: #{tpu_custom_call.1} parent=23 // pred_check
          %p165 = pneg %p58
        $region26: #{tpu_custom_call.1} parent=23 // pred_check_branch
          %167 = sbr.rel (%p165) target = $region28
        $region27: #{tpu_custom_call.1} parent=23 // pred_region
          %169 = dma.done %s161, 256
        $region28: #{tpu_custom_call.1} parent=23 // pred_fallthru
          _
        %s170 = sand.u32 %s45, 1
        %s171 = scalar_lea.sflag [#allocation4], %s170
        %s172 = sand.u32 %s45, 1
        %s173 = smul.addr %s172, 16
        %s174 = scalar_lea.vmem [#allocation3], %s173
        %p175 = pneg %p58
        %p176 = pneg %p55
        %p177 = pneg %p84
        %p178 = pneg %p81
        %s179 = sand.u32 %s71, 1
        %s180 = scalar_lea.sflag [#allocation5], %s179
        %s181 = sand.u32 %s71, 1
        %s182 = scalar_lea.vmem [#allocation6], %s181
        %p183 = pneg %p110
        %p184 = pneg %p107
        %s185 = sand.u32 %s97, 1
        %s186 = scalar_lea.sflag [#allocation8], %s185
        %s187 = sand.u32 %s97, 1
        %s188 = smul.addr %s187, 32
        %s189 = scalar_lea.vmem [#allocation7], %s188
        %s190 = smul.u32 2, %s28
        %p191 = scmp.eq.s32.totalorder %s28, 0
        // Predicated region
        $region29: #{tpu_custom_call.1} parent=23 // pred_check
          %p192 = pneg %p191
        $region30: #{tpu_custom_call.1} parent=23 // pred_check_branch
          %194 = sbr.rel (%p192) target = $region32
        $region31: #{tpu_custom_call.1} parent=23 // pred_region
          %vm195 = vcmask 261120
          %196 = vst.msk [vmem:[#allocation2] sm:$0xff] %vm195, 0.0
          %197 = vst.msk [vmem:[%s189] sm:$0xff] %vm195, 0.0
          %198 = vst.msk [vmem:[%s189 + $0x8] sm:$0xff] %vm195, 0.0
          %199 = vst.msk [vmem:[%s189 + $0x10] sm:$0xff] %vm195, 0.0
          %200 = vst.msk [vmem:[%s189 + $0x18] sm:$0xff] %vm195, 0.0
        $region32: #{tpu_custom_call.1} parent=23 // pred_fallthru
          _
        %v201 = vld [vmem:[%s164] sm:$0xff]
        %v202 = vld [vmem:[%s164 + $0x8] sm:$0xff]
        %v203 = vld [vmem:[#allocation2] sm:$0x1]
        %vm204 = vcmask 261120
        %v205 = vsel %vm204, %v201, 0.0
        %v206 = vsel %vm204, %v202, 0.0
        %v207 = vadd.f32 %v205, %v206
        %v208 = vrot.slane %v207, 4
        %v209 = vadd.f32 %v207, %v208
        %v210 = vrot.slane %v209, 2
        %v211 = vadd.f32 %v209, %v210
        %v212 = vrot.slane %v211, 1
        %v213 = vadd.f32 %v211, %v212
        %v214 = vadd.f32 %v203, %v213
        %vm215 = vcmask 253952
        %216 = vst.msk [vmem:[#allocation2] sm:$0x1] %vm215, %v214
        %v217 = vld [vmem:[%s189] sm:$0xff]
        %v218 = vld [vmem:[%s189 + $0x8] sm:$0xff]
        %v219 = vld [vmem:[%s189 + $0x10] sm:$0xff]
        %v220 = vld [vmem:[%s189 + $0x18] sm:$0xff]
        %221 = vxpose.xlu0.b32.start [1/16] %v201, 128
        %222 = vxpose.xlu0.b32.cont [2/16] %v202, 128
        %223 = vxpose.xlu0.b32.cont [3/16] 0.0, 128
        %224 = vxpose.xlu0.b32.cont [4/16] 0.0, 128
        %225 = vxpose.xlu0.b32.cont [5/16] 0.0, 128
        %226 = vxpose.xlu0.b32.cont [6/16] 0.0, 128
        %227 = vxpose.xlu0.b32.cont [7/16] 0.0, 128
        %228 = vxpose.xlu0.b32.cont [8/16] 0.0, 128
        %229 = vxpose.xlu0.b32.cont [9/16] 0.0, 128
        %230 = vxpose.xlu0.b32.cont [10/16] 0.0, 128
        %231 = vxpose.xlu0.b32.cont [11/16] 0.0, 128
        %232 = vxpose.xlu0.b32.cont [12/16] 0.0, 128
        %233 = vxpose.xlu0.b32.cont [13/16] 0.0, 128
        %234 = vxpose.xlu0.b32.cont [14/16] 0.0, 128
        %235 = vxpose.xlu0.b32.cont [15/16] 0.0, 128
        %236 = vxpose.xlu0.b32.end [16/16] 0.0, 128
        %v237 = vpop.trf.xlu0
        %v238 = vpop.trf.xlu0
        %v239 = vpop.trf.xlu0
        %v240 = vpop.trf.xlu0
        %v241 = vpop.trf.xlu0
        %v242 = vpop.trf.xlu0
        %v243 = vpop.trf.xlu0
        %v244 = vpop.trf.xlu0
        %v245 = vpop.trf.xlu0
        %v246 = vpop.trf.xlu0
        %v247 = vpop.trf.xlu0
        %v248 = vpop.trf.xlu0
        %v249 = vpop.trf.xlu0
        %v250 = vpop.trf.xlu0
        %v251 = vpop.trf.xlu0
        %v252 = vpop.trf.xlu0
        %vm253 = vcmask 130048
        %v255 = vsel %vm253, %v237, 0
        %v258 = vsel %vm253, %v238, 0
        %v261 = vsel %vm253, %v239, 0
        %v264 = vsel %vm253, %v240, 0
        %266 = vmatpush.msra.mxu0 0.0
        %267 = vmatpush.msra.mxu0 0.0
        %268 = vmatpush.msra.mxu0 0.0
        %269 = vmatpush.msra.mxu0 0.0
        %270 = vmatpush.msra.mxu0 0.0
        %271 = vmatpush.msra.mxu0 0.0
        %272 = vmatpush.msra.mxu0 0.0
        %273 = vmatpush.msra.mxu0 0.0
        %274 = vmatpush.msra.mxu0 0.0
        %275 = vmatpush.msra.mxu0 0.0
        %276 = vmatpush.msra.mxu0 0.0
        %277 = vmatpush.msra.mxu0 0.0
        %278 = vmatpush.msra.mxu0 0.0
        %279 = vmatpush.msra.mxu0 0.0
        %280 = vmatpush.msra.mxu0 %v202
        %281 = vmatpush.msra.mxu0 %v201
        %282 = vmatmul.f32.gmra.mxu0 %v255
        %v283 = vpop.f32.mrf.mxu0
        %v284 = vadd.f32 0.0, %v283
        %285 = vmatmul.f32.gmra.mxu0 %v258
        %v286 = vpop.f32.mrf.mxu0
        %v287 = vadd.f32 0.0, %v286
        %288 = vmatmul.f32.gmra.mxu0 %v261
        %v289 = vpop.f32.mrf.mxu0
        %v290 = vadd.f32 0.0, %v289
        %291 = vmatmul.f32.gmra.mxu0 %v264
        %v292 = vpop.f32.mrf.mxu0
        %v293 = vadd.f32 0.0, %v292
        %294 = vdwg.mxu0
        %v295 = vadd.f32 %v217, %v284
        %v296 = vadd.f32 %v218, %v287
        %v297 = vadd.f32 %v219, %v290
        %v298 = vadd.f32 %v220, %v293
        %299 = vst.msk [vmem:[%s189] sm:$0xff] %vm204, %v295
        %300 = vst.msk [vmem:[%s189 + $0x8] sm:$0xff] %vm204, %v296
        %301 = vst.msk [vmem:[%s189 + $0x10] sm:$0xff] %vm204, %v297
        %302 = vst.msk [vmem:[%s189 + $0x18] sm:$0xff] %vm204, %v298
        // Predicated region
        $region33: #{tpu_custom_call.1} parent=23 // pred_check
          %p303 = pneg %p191
        $region34: #{tpu_custom_call.1} parent=23 // pred_check_branch
          %305 = sbr.rel (%p303) target = $region36
        $region35: #{tpu_custom_call.1} parent=23 // pred_region
          %v306 = vld [vmem:[#allocation2] sm:$0xff]
          %307 = vxpose.xlu0.b32.start [1/16] %v306, 128
          %308 = vxpose.xlu0.b32.cont [2/16] 0.0, 128
          %309 = vxpose.xlu0.b32.cont [3/16] 0.0, 128
          %310 = vxpose.xlu0.b32.cont [4/16] 0.0, 128
          %311 = vxpose.xlu0.b32.cont [5/16] 0.0, 128
          %312 = vxpose.xlu0.b32.cont [6/16] 0.0, 128
          %313 = vxpose.xlu0.b32.cont [7/16] 0.0, 128
          %314 = vxpose.xlu0.b32.cont [8/16] 0.0, 128
          %315 = vxpose.xlu0.b32.cont [9/16] 0.0, 128
          %316 = vxpose.xlu0.b32.cont [10/16] 0.0, 128
          %317 = vxpose.xlu0.b32.cont [11/16] 0.0, 128
          %318 = vxpose.xlu0.b32.cont [12/16] 0.0, 128
          %319 = vxpose.xlu0.b32.cont [13/16] 0.0, 128
          %320 = vxpose.xlu0.b32.cont [14/16] 0.0, 128
          %321 = vxpose.xlu0.b32.cont [15/16] 0.0, 128
          %322 = vxpose.xlu0.b32.end [16/16] 0.0, 128
          %v323 = vpop.trf.xlu0
          %v324 = vpop.trf.xlu0
          %v325 = vpop.trf.xlu0
          %v326 = vpop.trf.xlu0
          %v327 = vpop.trf.xlu0
          %v328 = vpop.trf.xlu0
          %v329 = vpop.trf.xlu0
          %v330 = vpop.trf.xlu0
          %v331 = vpop.trf.xlu0
          %v332 = vpop.trf.xlu0
          %v333 = vpop.trf.xlu0
          %v334 = vpop.trf.xlu0
          %v335 = vpop.trf.xlu0
          %v336 = vpop.trf.xlu0
          %v337 = vpop.trf.xlu0
          %v338 = vpop.trf.xlu0
          %vm339 = vcmask 64512
          %v341 = vsel %vm339, %v323, 0
          %v344 = vsel %vm339, %v324, 0
          %v347 = vsel %vm339, %v325, 0
          %v350 = vsel %vm339, %v326, 0
          %352 = vmatpush.msra.mxu0 0.0
          %353 = vmatpush.msra.mxu0 0.0
          %354 = vmatpush.msra.mxu0 0.0
          %355 = vmatpush.msra.mxu0 0.0
          %356 = vmatpush.msra.mxu0 0.0
          %357 = vmatpush.msra.mxu0 0.0
          %358 = vmatpush.msra.mxu0 0.0
          %359 = vmatpush.msra.mxu0 0.0
          %360 = vmatpush.msra.mxu0 0.0
          %361 = vmatpush.msra.mxu0 0.0
          %362 = vmatpush.msra.mxu0 0.0
          %363 = vmatpush.msra.mxu0 0.0
          %364 = vmatpush.msra.mxu0 0.0
          %365 = vmatpush.msra.mxu0 0.0
          %366 = vmatpush.msra.mxu0 0.0
          %367 = vmatpush.msra.mxu0 %v306
          %368 = vmatmul.f32.gmra.mxu0 %v341
          %v369 = vpop.f32.mrf.mxu0
          %v370 = vadd.f32 0.0, %v369
          %371 = vmatmul.f32.gmra.mxu0 %v344
          %v372 = vpop.f32.mrf.mxu0
          %v373 = vadd.f32 0.0, %v372
          %374 = vmatmul.f32.gmra.mxu0 %v347
          %v375 = vpop.f32.mrf.mxu0
          %v376 = vadd.f32 0.0, %v375
          %377 = vmatmul.f32.gmra.mxu0 %v350
          %v378 = vpop.f32.mrf.mxu0
          %v379 = vadd.f32 0.0, %v378
          %380 = vdwg.mxu0
          %v381 = vld [vmem:[%s189] sm:$0xff]
          %v382 = vld [vmem:[%s189 + $0x8] sm:$0xff]
          %v383 = vld [vmem:[%s189 + $0x10] sm:$0xff]
          %v384 = vld [vmem:[%s189 + $0x18] sm:$0xff]
          %v385 = vmul.f32 %v370, 0.0625
          %v386 = vmul.f32 %v373, 0.0625
          %v387 = vmul.f32 %v376, 0.0625
          %v388 = vmul.f32 %v379, 0.0625
          %v389 = vsub.f32 %v381, %v385
          %v390 = vsub.f32 %v382, %v386
          %v391 = vsub.f32 %v383, %v387
          %v392 = vsub.f32 %v384, %v388
          %v393 = vmul.f32 %v389, 0.06666667
          %v394 = vmul.f32 %v390, 0.06666667
          %v395 = vmul.f32 %v391, 0.06666667
          %v396 = vmul.f32 %v392, 0.06666667
          %397 = vst.msk [vmem:[%s189] sm:$0xff] %vm204, %v393
          %398 = vst.msk [vmem:[%s189 + $0x8] sm:$0xff] %vm204, %v394
          %399 = vst.msk [vmem:[%s189 + $0x10] sm:$0xff] %vm204, %v395
          %400 = vst.msk [vmem:[%s189 + $0x18] sm:$0xff] %vm204, %v396
          %v401 = vmul.f32 %v306, 0.0625
          %402 = vst.msk [vmem:[%s182] sm:$0x1] %vm215, %v401
        $region36: #{tpu_custom_call.1} parent=23 // pred_fallthru
          _
        %s403 = sand.u32 %s71, 1
        %s404 = scalar_lea.sflag [#allocation5], %s403
        %s405 = sand.u32 %s71, 1
        %s406 = scalar_lea.vmem [#allocation6], %s405
        %s407 = sand.u32 %s97, 1
        %s408 = scalar_lea.sflag [#allocation8], %s407
        %s409 = sand.u32 %s97, 1
        %s410 = smul.addr %s409, 32
        %s411 = scalar_lea.vmem [#allocation7], %s410
        // Predicated region
        $region37: #{tpu_custom_call.1} parent=23 // pred_check
          %p412 = pneg %p81
        $region38: #{tpu_custom_call.1} parent=23 // pred_check_branch
          %414 = sbr.rel (%p412) target = $region40
        $region39: #{tpu_custom_call.1} parent=23 // pred_region
          %416 = vsyncadd %s404, 0
          %s417 = scalar_lea.hbm %s1, %s27
          %s419 = sshll.u32 %s406, 4
          %s420 = int_to_ptr.vmem [resolvable:$true] %s419
          %s421 = sshll.u32 %s417, 4
          %s422 = int_to_ptr.hbm [resolvable:$true] %s421
          %424 = dma.vmem_to_hbm [thread:$0]  %s420, 16, %s422, %s404
        $region40: #{tpu_custom_call.1} parent=23 // pred_fallthru
          _
        // Predicated region
        $region41: #{tpu_custom_call.1} parent=23 // pred_check
          %p425 = pneg %p107
        $region42: #{tpu_custom_call.1} parent=23 // pred_check_branch
          %427 = sbr.rel (%p425) target = $region44
        $region43: #{tpu_custom_call.1} parent=23 // pred_region
          %429 = vsyncadd %s408, 0
          %s430 = smul.addr %s27, 4
          %s431 = smul.addr %s430, 8
          %s432 = scalar_lea.hbm %s2, %s431
          %s433 = sshll.u32 %s411, 4
          %s434 = int_to_ptr.vmem [resolvable:$true] %s433
          %s435 = sshll.u32 %s432, 4
          %s436 = int_to_ptr.hbm [resolvable:$true] %s435
          %441 = dma.vmem_to_hbm [thread:$0]  %s434, 512, %s436, %s408, 128, 128, 8
        $region44: #{tpu_custom_call.1} parent=23 // pred_fallthru
          _
      $region24: #{tpu_custom_call.1} parent=5 // pred_fallthru
        _
      %p442 = scmp.le.s32.totalorder 2, %s18
      // Predicated region
      $region45: #{tpu_custom_call.1} parent=5 // pred_check
        %p443 = pneg %p442
      $region46: #{tpu_custom_call.1} parent=5 // pred_check_branch
        %445 = sbr.rel (%p443) target = $region48
      $region47: #{tpu_custom_call.1} parent=5 // pred_region
        %s446 = ssub.s32 %s18, 2
        // Predicated region
        $region49: #{tpu_custom_call.1} parent=47 // pred_check
          %p447 = pneg %p87
        $region50: #{tpu_custom_call.1} parent=47 // pred_check_branch
          %449 = sbr.rel (%p447) target = $region52
        $region51: #{tpu_custom_call.1} parent=47 // pred_region
          %s450 = sand.u32 %s72, 1
          %s451 = scalar_lea.sflag [#allocation5], %s450
          %s452 = sand.u32 %s72, 1
          %s453 = scalar_lea.vmem [#allocation6], %s452
          %455 = dma.done %s451, 16
        $region52: #{tpu_custom_call.1} parent=47 // pred_fallthru
          _
        // Predicated region
        $region53: #{tpu_custom_call.1} parent=47 // pred_check
          %p456 = pneg %p113
        $region54: #{tpu_custom_call.1} parent=47 // pred_check_branch
          %458 = sbr.rel (%p456) target = $region56
        $region55: #{tpu_custom_call.1} parent=47 // pred_region
          %s459 = sand.u32 %s98, 1
          %s460 = scalar_lea.sflag [#allocation8], %s459
          %s461 = sand.u32 %s98, 1
          %s462 = smul.addr %s461, 32
          %s463 = scalar_lea.vmem [#allocation7], %s462
          %465 = dma.done %s460, 512
        $region56: #{tpu_custom_call.1} parent=47 // pred_fallthru
          _
      $region48: #{tpu_custom_call.1} parent=5 // pred_fallthru
        _
    $region6: #{tpu_custom_call.1} parent=1 // loop_footer
      %s22 = sadd.s32 1, %s18
    $region7: #{tpu_custom_call.1} parent=1 // loop_footer_branch
      %17 = sbr.rel target = $region3
    $region8: #{tpu_custom_call.1} parent=1 // loop_exit
      _
    %466 = vsyncpa [#allocation4], 1
    %s467 = scalar_lea.sflag [#allocation4], 1
    %468 = vsyncpa %s467, 1
    %469 = vsyncpa [#allocation5], 1
    %s470 = scalar_lea.sflag [#allocation5], 1
    %471 = vsyncpa %s470, 1
    %472 = vsyncpa [#allocation8], 1
    %s473 = scalar_lea.sflag [#allocation8], 1
    %474 = vsyncpa %s473, 1

</llo_original>
